<compile_context>
chip_gen: v7x
topology: tpu7x:2x2x1
jax: 0.10.0
libtpu: 0.0.40
codegen_flags: <defaults>
</compile_context>

<pallas_src>
import jax
import jax.numpy as jnp
from jax.experimental import pallas as pl
from jax.experimental.pallas import tpu as pltpu


def gru_disc_kernel(x_ref, h0_ref, wih_ref, whh_ref, bgi_ref, bhn_ref,
                    len_ref, maxlen_ref, wfc_ref, bfc_ref,
                    hidden_out_ref, pred_ref, gi_scr):
    """Whole sequence resident in VMEM; GRU time loop runs inside the kernel."""
    T, B, GH = gi_scr.shape
    H = h0_ref.shape[-1]

    # ---- hoisted input projection (off the sequential dependency chain) ----
    # One fused [T*B, E] x [E, 3H] bf16 matmul; r/z biases pre-folded into bgi.
    gi = jnp.dot(x_ref[...], wih_ref[...], preferred_element_type=jnp.float32)
    gi_scr[...] = (gi + bgi_ref[...]).reshape(T, B, GH)   # layout no-op (B % 8 == 0, f32)

    # ---- loop-invariant values hoisted (JAX does not CSE broadcast_in_dim) ----
    w_hh = whh_ref[...]                                   # bf16 [H, 3H], fused gates
    b_hn = jnp.broadcast_to(bhn_ref[...], (B, H))         # n-gate hidden bias
    len_b = jnp.broadcast_to(len_ref[...], (B, H))        # int32 lengths
    max_len = maxlen_ref[0, 0]                            # SMEM scalar: lengths sorted desc

    def step(t, h_prev):
        # Single fused MXU issue on the serial chain; gate split lands on
        # VPU/XLU slots that have slack.
        gh = jnp.dot(h_prev.astype(jnp.bfloat16), w_hh,
                     preferred_element_type=jnp.float32)  # [B, 3H]
        gi_t = gi_scr[t]                                  # [B, 3H]
        # PyTorch GRU gate order: r, z, n.
        r = jax.nn.sigmoid(gi_t[:, :H] + gh[:, :H])
        z = jax.nn.sigmoid(gi_t[:, H:2 * H] + gh[:, H:2 * H])
        n = jnp.tanh(gi_t[:, 2 * H:] + r * (gh[:, 2 * H:] + b_hn))
        h_new = (1.0 - z) * n + z * h_prev
        # pack_padded_sequence semantics: freeze hidden once t >= length[i].
        return jnp.where(t < len_b, h_new, h_prev)

    # Recurrence bounded at the true max length (skipped steps are no-ops).
    h = jax.lax.fori_loop(0, max_len, step, h0_ref[...])

    # final hidden / prediction written exactly once
    hidden_out_ref[...] = h
    logits = jnp.dot(h, wfc_ref[...], preferred_element_type=jnp.float32) + bfc_ref[...]
    pred_ref[...] = jnp.sum(jax.nn.sigmoid(logits), axis=0, keepdims=True) * (1.0 / B)


def seq_discriminator_forward(params, input_ids, img_emb, lengths):
    """Mirrors SeqDiscriminator.forward for the 2-D (token id) input path.

    Returns (sigmoid(fc(decoded)).mean(0) with shape [1], hidden with shape [1, B, H]).
    `hidden` is in length-sorted (descending) order, matching the PyTorch reference.
    """
    emb_w = params["embedding"]                           # [V, E]
    B, T = input_ids.shape
    H = params["w_hh"].shape[0]

    # torch.sort(lengths, descending=True) + reorder of input / img_emb
    sorted_idx = jnp.argsort(-lengths)
    lengths_s = lengths[sorted_idx].astype(jnp.int32)
    input_s = input_ids[sorted_idx]
    img_s = img_emb[sorted_idx].astype(jnp.float32)

    # Embedding lookup emitted directly in sequence-major, flattened (T*B, E)
    # bf16 layout (no separate [B,T,E]->[T,B,E] HBM round-trip transpose).
    # word_dropout -> identity (eval-mode semantics).
    # TODO(synk): train-mode nn.Dropout(p=0.5) randomness not reproduced.
    x_flat = emb_w.astype(jnp.bfloat16)[input_s.T.reshape(-1)]   # [T*B, E] bf16

    # Fused gate weights stay fused (r|z|n along 3H); only the biases are
    # pre-folded: r/z get b_ih + b_hh, n keeps b_ih (input side) and b_hh
    # (hidden side, scaled by r in-kernel).  One-time glue.
    w_ih, w_hh = params["w_ih"], params["w_hh"]           # [E, 3H], [H, 3H]
    b_ih, b_hh = params["b_ih"], params["b_hh"]           # [1, 3H]
    b_gi = jnp.concatenate(
        [b_ih[:, :2 * H] + b_hh[:, :2 * H], b_ih[:, 2 * H:]], axis=1)   # [1, 3H]
    b_hn = b_hh[:, 2 * H:]                                # [1, H]

    len2d = lengths_s.reshape(B, 1)                       # VMEM, for the freeze mask
    maxlen = lengths_s[0].reshape(1, 1)                   # SMEM scalar loop bound

    vmem = pl.BlockSpec(memory_space=pltpu.MemorySpace.VMEM)
    smem = pl.BlockSpec(memory_space=pltpu.MemorySpace.SMEM)

    # Footprint here is < 1 MiB; explicit limit is future-proofing for v5e's
    # 16 MiB scoped default (and stays below v7x's 64 MiB physical VMEM).
    hidden_out, pred = pl.pallas_call(
        gru_disc_kernel,
        out_shape=(jax.ShapeDtypeStruct((B, H), jnp.float32),
                   jax.ShapeDtypeStruct((1, 1), jnp.float32)),
        in_specs=[vmem, vmem, vmem, vmem, vmem, vmem, vmem, smem, vmem, vmem],
        out_specs=(vmem, vmem),
        scratch_shapes=[pltpu.VMEM((T, B, 3 * H), jnp.float32)],
        compiler_params=pltpu.CompilerParams(vmem_limit_bytes=32 * 1024 * 1024),
    )(x_flat, img_s,
      w_ih.astype(jnp.bfloat16), w_hh.astype(jnp.bfloat16),
      b_gi, b_hn, len2d, maxlen, params["w_fc"], params["b_fc"])

    pred_mean = pred.reshape(1)                           # torch.sigmoid(pred).mean(0)
    hidden = hidden_out[None, :, :]                       # [num_layers=1, B, H]
    # TODO(synk): self.img_embedding(img_emb[:, :masked_size]) is computed in the
    # reference forward but never used in its return value; omitted here.
    return pred_mean, hidden


def reference_forward(params, input_ids, img_emb, lengths):
    """Pure-JAX f32 reference (same math, lax.scan) for validation."""
    sorted_idx = jnp.argsort(-lengths)
    lengths_s = lengths[sorted_idx].astype(jnp.int32)
    x = params["embedding"][input_ids[sorted_idx]]        # [B, T, E]
    h = img_emb[sorted_idx]
    B, T, _ = x.shape
    H = h.shape[-1]

    def step(h, inp):
        x_t, t = inp
        gi = x_t @ params["w_ih"] + params["b_ih"]
        gh = h @ params["w_hh"] + params["b_hh"]
        r = jax.nn.sigmoid(gi[:, :H] + gh[:, :H])
        z = jax.nn.sigmoid(gi[:, H:2 * H] + gh[:, H:2 * H])
        n = jnp.tanh(gi[:, 2 * H:] + r * gh[:, 2 * H:])
        h_new = (1.0 - z) * n + z * h
        valid = (t < lengths_s).astype(jnp.float32)[:, None]
        return valid * h_new + (1.0 - valid) * h, None

    h_final, _ = jax.lax.scan(step, h, (jnp.transpose(x, (1, 0, 2)), jnp.arange(T)))
    pred = jax.nn.sigmoid(h_final @ params["w_fc"] + params["b_fc"]).mean(0)
    return pred, h_final[None]


def init_params(key, vocab, E, H):
    ks = jax.random.split(key, 7)
    s = 0.1
    return dict(
        embedding=jax.random.normal(ks[0], (vocab, E), jnp.float32) * s,
        w_ih=jax.random.normal(ks[1], (E, 3 * H), jnp.float32) * s,
        w_hh=jax.random.normal(ks[2], (H, 3 * H), jnp.float32) * s,
        b_ih=jax.random.normal(ks[3], (1, 3 * H), jnp.float32) * s,
        b_hh=jax.random.normal(ks[4], (1, 3 * H), jnp.float32) * s,
        w_fc=jax.random.normal(ks[5], (H, 1), jnp.float32) * s,
        b_fc=jax.random.normal(ks[6], (1, 1), jnp.float32) * s,
    )


if __name__ == "__main__":
    # small shapes consistent with the module: latent_size=H=32 (GRU hidden),
    # embedding_dim=E=32, vocab=50, batch=8, seq=8
    B, T, V, E, H = 8, 8, 50, 32, 32

    key = jax.random.PRNGKey(0)
    k_in, k_img, k_len = jax.random.split(key, 3)
    params = init_params(jax.random.PRNGKey(42), V, E, H)

    input_ids = jax.random.randint(k_in, (B, T), 0, V)
    img_emb = jax.random.normal(k_img, (B, H), jnp.float32)
    lengths = jax.random.randint(k_len, (B,), 1, T + 1).astype(jnp.int32)

    pred_mean, hidden = seq_discriminator_forward(params, input_ids, img_emb, lengths)
    jax.block_until_ready((pred_mean, hidden))

    ref_pred, ref_hidden = reference_forward(params, input_ids, img_emb, lengths)
    assert pred_mean.shape == (1,) and hidden.shape == (1, B, H)
    # bf16 matmul operands (f32 accumulate / f32 gate math) => ~1e-3 level error.
    assert jnp.allclose(pred_mean, ref_pred, atol=1e-2, rtol=1e-2)
    assert jnp.allclose(hidden, ref_hidden, atol=1e-2, rtol=1e-2)

    print("KERNEL_OK")
</pallas_src>

<mosaic_0001>
module attributes {stable_mosaic.version = 11 : i64} {
  func.func @gru_disc_kernel(%arg0: memref<64x32xbf16, #tpu.memory_space<vmem>>, %arg1: memref<8x32xf32, #tpu.memory_space<vmem>>, %arg2: memref<32x96xbf16, #tpu.memory_space<vmem>>, %arg3: memref<32x96xbf16, #tpu.memory_space<vmem>>, %arg4: memref<1x96xf32, #tpu.memory_space<vmem>>, %arg5: memref<1x32xf32, #tpu.memory_space<vmem>>, %arg6: memref<8x1xi32, #tpu.memory_space<vmem>>, %arg7: memref<1x1xi32, #tpu.memory_space<smem>>, %arg8: memref<32x1xf32, #tpu.memory_space<vmem>>, %arg9: memref<1x1xf32, #tpu.memory_space<vmem>>, %arg10: memref<8x32xf32, #tpu.memory_space<vmem>>, %arg11: memref<1x1xf32, #tpu.memory_space<vmem>>, %arg12: memref<8x8x96xf32, #tpu.memory_space<vmem>>) attributes {dimension_semantics = [], scalar_prefetch = 0 : i64, scratch_operands = 1 : i64, tpu.core_type = #tpu.core_type<tc>} {
    %c0 = arith.constant 0 : index
    %c0_0 = arith.constant 0 : index
    %0 = vector.load %arg0[%c0, %c0_0] : memref<64x32xbf16, #tpu.memory_space<vmem>>, vector<64x32xbf16>
    %c0_1 = arith.constant 0 : index
    %c0_2 = arith.constant 0 : index
    %1 = vector.load %arg2[%c0_1, %c0_2] : memref<32x96xbf16, #tpu.memory_space<vmem>>, vector<32x96xbf16>
    %cst = arith.constant dense<0.000000e+00> : vector<64x96xf32>
    %2 = tpu.matmul %0, %1, %cst {dimension_numbers = #tpu.dot_dimension_numbers<[1], [0], [0], [1], [0, 0, 1, 1], [], []>} : vector<64x32xbf16>, vector<32x96xbf16>, vector<64x96xf32> -> vector<64x96xf32>
    %c0_3 = arith.constant 0 : index
    %c0_4 = arith.constant 0 : index
    %3 = vector.load %arg4[%c0_3, %c0_4] : memref<1x96xf32, #tpu.memory_space<vmem>>, vector<1x96xf32>
    %4 = vector.broadcast %3 : vector<1x96xf32> to vector<64x96xf32>
    %5 = arith.addf %2, %4 : vector<64x96xf32>
    %6 = vector.shape_cast %5 : vector<64x96xf32> to vector<8x8x96xf32>
    %c0_5 = arith.constant 0 : index
    %c0_6 = arith.constant 0 : index
    %c0_7 = arith.constant 0 : index
    %7 = vector.load %arg12[%c0_5, %c0_6, %c0_7] : memref<8x8x96xf32, #tpu.memory_space<vmem>>, vector<8x8x96xf32>
    tpu.vector_store %arg12[%c0_5, %c0_6, %c0_7], %6 {strides = array<i32>} : memref<8x8x96xf32, #tpu.memory_space<vmem>>, vector<8x8x96xf32>,
    %c0_8 = arith.constant 0 : index
    %c0_9 = arith.constant 0 : index
    %8 = vector.load %arg3[%c0_8, %c0_9] : memref<32x96xbf16, #tpu.memory_space<vmem>>, vector<32x96xbf16>
    %c0_10 = arith.constant 0 : index
    %c0_11 = arith.constant 0 : index
    %9 = vector.load %arg5[%c0_10, %c0_11] : memref<1x32xf32, #tpu.memory_space<vmem>>, vector<1x32xf32>
    %10 = vector.shape_cast %9 : vector<1x32xf32> to vector<1x32xf32>
    %11 = vector.broadcast %10 : vector<1x32xf32> to vector<8x32xf32>
    %c0_12 = arith.constant 0 : index
    %c0_13 = arith.constant 0 : index
    %12 = vector.load %arg6[%c0_12, %c0_13] : memref<8x1xi32, #tpu.memory_space<vmem>>, vector<8x1xi32>
    %13 = vector.shape_cast %12 : vector<8x1xi32> to vector<8x1xi32>
    %14 = vector.broadcast %13 : vector<8x1xi32> to vector<8x32xi32>
    %c0_14 = arith.constant 0 : index
    %c0_15 = arith.constant 0 : index
    %15 = memref.load %arg7[%c0_14, %c0_15] : memref<1x1xi32, #tpu.memory_space<smem>>
    %c0_16 = arith.constant 0 : index
    %c0_17 = arith.constant 0 : index
    %16 = vector.load %arg1[%c0_16, %c0_17] : memref<8x32xf32, #tpu.memory_space<vmem>>, vector<8x32xf32>
    %c0_i32 = arith.constant 0 : i32
    %17 = arith.subi %15, %c0_i32 : i32
    %18 = arith.addi %c0_i32, %17 : i32
    %c1_i32 = arith.constant 1 : i32
    %19 = scf.for %arg13 = %c0_i32 to %18 step %c1_i32 iter_args(%arg14 = %16) -> (vector<8x32xf32>)  : i32 {
      %36 = arith.truncf %arg14 : vector<8x32xf32> to vector<8x32xbf16>
      %cst_30 = arith.constant dense<0.000000e+00> : vector<8x96xf32>
      %37 = tpu.matmul %36, %8, %cst_30 {dimension_numbers = #tpu.dot_dimension_numbers<[1], [0], [0], [1], [0, 0, 1, 1], [], []>} : vector<8x32xbf16>, vector<32x96xbf16>, vector<8x96xf32> -> vector<8x96xf32>
      %38 = arith.index_cast %arg13 : i32 to index
      %c0_31 = arith.constant 0 : index
      %c0_32 = arith.constant 0 : index
      %39 = vector.load %arg12[%38, %c0_31, %c0_32] : memref<8x8x96xf32, #tpu.memory_space<vmem>>, vector<1x8x96xf32>
      %40 = vector.shape_cast %39 : vector<1x8x96xf32> to vector<8x96xf32>
      %41 = vector.extract_strided_slice %40 {offsets = [0, 0], sizes = [8, 32], strides = [1, 1]} : vector<8x96xf32> to vector<8x32xf32>
      %42 = vector.extract_strided_slice %37 {offsets = [0, 0], sizes = [8, 32], strides = [1, 1]} : vector<8x96xf32> to vector<8x32xf32>
      %43 = arith.addf %41, %42 : vector<8x32xf32>
      %44 = arith.negf %43 : vector<8x32xf32>
      %45 = math.exp %44 : vector<8x32xf32>
      %cst_33 = arith.constant 1.000000e+00 : f32
      %46 = vector.broadcast %cst_33 : f32 to vector<8x32xf32>
      %47 = arith.addf %46, %45 : vector<8x32xf32>
      %48 = arith.divf %46, %47 : vector<8x32xf32>
      %49 = vector.extract_strided_slice %40 {offsets = [0, 32], sizes = [8, 32], strides = [1, 1]} : vector<8x96xf32> to vector<8x32xf32>
      %50 = vector.extract_strided_slice %37 {offsets = [0, 32], sizes = [8, 32], strides = [1, 1]} : vector<8x96xf32> to vector<8x32xf32>
      %51 = arith.addf %49, %50 : vector<8x32xf32>
      %52 = arith.negf %51 : vector<8x32xf32>
      %53 = math.exp %52 : vector<8x32xf32>
      %cst_34 = arith.constant 1.000000e+00 : f32
      %54 = vector.broadcast %cst_34 : f32 to vector<8x32xf32>
      %55 = arith.addf %54, %53 : vector<8x32xf32>
      %56 = arith.divf %54, %55 : vector<8x32xf32>
      %57 = vector.extract_strided_slice %40 {offsets = [0, 64], sizes = [8, 32], strides = [1, 1]} : vector<8x96xf32> to vector<8x32xf32>
      %58 = vector.extract_strided_slice %37 {offsets = [0, 64], sizes = [8, 32], strides = [1, 1]} : vector<8x96xf32> to vector<8x32xf32>
      %59 = arith.addf %58, %11 : vector<8x32xf32>
      %60 = arith.mulf %48, %59 : vector<8x32xf32>
      %61 = arith.addf %57, %60 : vector<8x32xf32>
      %62 = math.tanh %61 : vector<8x32xf32>
      %cst_35 = arith.constant 1.000000e+00 : f32
      %63 = vector.broadcast %cst_35 : f32 to vector<8x32xf32>
      %64 = arith.subf %63, %56 : vector<8x32xf32>
      %65 = arith.mulf %64, %62 : vector<8x32xf32>
      %66 = arith.mulf %56, %arg14 : vector<8x32xf32>
      %67 = arith.addf %65, %66 : vector<8x32xf32>
      %68 = vector.broadcast %arg13 : i32 to vector<8x32xi32>
      %69 = arith.cmpi slt, %68, %14 : vector<8x32xi32>
      %70 = arith.select %69, %67, %arg14 : vector<8x32xi1>, vector<8x32xf32>
      scf.yield %70 : vector<8x32xf32>
    }
    %c0_18 = arith.constant 0 : index
    %c0_19 = arith.constant 0 : index
    %20 = vector.load %arg10[%c0_18, %c0_19] : memref<8x32xf32, #tpu.memory_space<vmem>>, vector<8x32xf32>
    tpu.vector_store %arg10[%c0_18, %c0_19], %19 {strides = array<i32>} : memref<8x32xf32, #tpu.memory_space<vmem>>, vector<8x32xf32>,
    %c0_20 = arith.constant 0 : index
    %c0_21 = arith.constant 0 : index
    %21 = vector.load %arg8[%c0_20, %c0_21] : memref<32x1xf32, #tpu.memory_space<vmem>>, vector<32x1xf32>
    %cst_22 = arith.constant dense<0.000000e+00> : vector<8x1xf32>
    %22 = tpu.matmul %19, %21, %cst_22 {dimension_numbers = #tpu.dot_dimension_numbers<[1], [0], [0], [1], [0, 0, 1, 1], [], []>} : vector<8x32xf32>, vector<32x1xf32>, vector<8x1xf32> -> vector<8x1xf32>
    %c0_23 = arith.constant 0 : index
    %c0_24 = arith.constant 0 : index
    %23 = vector.load %arg9[%c0_23, %c0_24] : memref<1x1xf32, #tpu.memory_space<vmem>>, vector<1x1xf32>
    %24 = vector.broadcast %23 : vector<1x1xf32> to vector<8x1xf32>
    %25 = arith.addf %22, %24 : vector<8x1xf32>
    %26 = arith.negf %25 : vector<8x1xf32>
    %27 = math.exp %26 : vector<8x1xf32>
    %cst_25 = arith.constant 1.000000e+00 : f32
    %28 = vector.broadcast %cst_25 : f32 to vector<8x1xf32>
    %29 = arith.addf %28, %27 : vector<8x1xf32>
    %30 = arith.divf %28, %29 : vector<8x1xf32>
    %cst_26 = arith.constant dense<0.000000e+00> : vector<1xf32>
    %31 = vector.multi_reduction <add>, %30, %cst_26 [0] : vector<8x1xf32> to vector<1xf32>
    %32 = vector.shape_cast %31 : vector<1xf32> to vector<1x1xf32>
    %cst_27 = arith.constant 1.250000e-01 : f32
    %33 = vector.broadcast %cst_27 : f32 to vector<1x1xf32>
    %34 = arith.mulf %32, %33 : vector<1x1xf32>
    %c0_28 = arith.constant 0 : index
    %c0_29 = arith.constant 0 : index
    %35 = vector.load %arg11[%c0_28, %c0_29] : memref<1x1xf32, #tpu.memory_space<vmem>>, vector<1x1xf32>
    tpu.vector_store %arg11[%c0_28, %c0_29], %34 {strides = array<i32>} : memref<1x1xf32, #tpu.memory_space<vmem>>, vector<1x1xf32>,
    return
  }
}

</mosaic_0001>

<llo_original>
// kernel: tpu_custom_call.1
$region0: #{tpu_custom_call.1}
  #allocation0 [shape = 'u32[]', space=smem, size = 0x4, offset = 0x4, fixed_abs, tag = 'smem constant byte address 0x4 - core index']
  #allocation1 [shape = 'u32[144,128]{1,0:T(1,128)}', space=vmem, size = 0x12000, scoped, tag = 'internal scratch']
  #allocation2 [shape = 'f32[8,8,96]{2,1,0:T(8,128)}', space=vmem, size = 0x8000, scoped, tag = 'scratch operand']
  #allocation3 [shape = 's32[1,1]{1,0:T(1,128)S(6)}', space=smem, size = 0x200, scoped, tag = 'scoped memory for tpu_custom_call.1']
  #allocation4 [shape = 'f32[1,1]{1,0:T(1,128)S(1)}', space=vmem, size = 0x200, scoped, tag = 'scoped memory for tpu_custom_call.1']
  %s0 = inlined_call_operand.vmem [shape: bf16[64,32], index: 0, kind: input, shape index: {}]
  %s1 = inlined_call_operand.vmem [shape: f32[8,32], index: 1, kind: input, shape index: {}]
  %s2 = inlined_call_operand.vmem [shape: bf16[32,96], index: 2, kind: input, shape index: {}]
  %s3 = inlined_call_operand.vmem [shape: bf16[32,96], index: 3, kind: input, shape index: {}]
  %s4 = inlined_call_operand.vmem [shape: f32[1,96], index: 4, kind: input, shape index: {}]
  %s5 = inlined_call_operand.vmem [shape: f32[1,32], index: 5, kind: input, shape index: {}]
  %s6 = inlined_call_operand.vmem [shape: s32[8,1], index: 6, kind: input, shape index: {}]
  %s7 = inlined_call_operand.<no memory space> [shape: s32[1,1], index: 7, kind: input, shape index: {}]
  %s8 = inlined_call_operand.vmem [shape: f32[32,1], index: 8, kind: input, shape index: {}]
  %s9 = inlined_call_operand.<no memory space> [shape: f32[1,1], index: 9, kind: input, shape index: {}]
  %s10 = inlined_call_operand.hbm [shape: f32[8,32], index: 10, kind: output, shape index: {0}]
  %s11 = inlined_call_operand.hbm [shape: f32[1,1], index: 11, kind: output, shape index: {1}]
  %12 = xla_tuple %s10, %s11
  %s13 = sld [smem:[#allocation0]]
  $region65: #{tpu_custom_call.1} parent=0
    _
  %s15 = ssub.s32 1, %s13
  %s16 = scalar_select 0, %s15, %s13
  %17 = sst [smem:[#allocation3]] %s7
  %v18 = vstv %s9
  %19 = vst [vmem:[#allocation4] sm:$0x1] %v18
  $region1: #{tpu_custom_call.1} parent=0
    #allocation5 [shape = 'u8[4096]{0}', space=vmem, size = 0x1000, scoped, tag = 'output window, operand 0, single buffered']
    #allocation6 [shape = 's32[1]{0}', space=sflag, size = 0x4, scoped, tag = 'scoped memory for tpu_custom_call.1']
    #allocation7 [shape = 'u8[512]{0}', space=vmem, size = 0x400, scoped, tag = 'output window, operand 1, single buffered']
    #allocation8 [shape = 's32[1]{0}', space=sflag, size = 0x4, scoped, tag = 'scoped memory for tpu_custom_call.1']
    %20 = vsyncpa [#allocation6], 0
    %21 = vsyncpa [#allocation8], 0
    // Predicated region
    $region2: #{tpu_custom_call.1} parent=1 // pred_check
      _
    $region3: #{tpu_custom_call.1} parent=1 // pred_check_branch
      %23 = sbr.rel (0) target = $region5
    $region4: #{tpu_custom_call.1} parent=1 // pred_region
      _
    $region5: #{tpu_custom_call.1} parent=1 // pred_fallthru
      _
    // Predicated region
    $region6: #{tpu_custom_call.1} parent=1 // pred_check
      _
    $region7: #{tpu_custom_call.1} parent=1 // pred_check_branch
      %25 = sbr.rel (0) target = $region9
    $region8: #{tpu_custom_call.1} parent=1 // pred_region
      _
    $region9: #{tpu_custom_call.1} parent=1 // pred_fallthru
      _
    // Predicated region
    $region10: #{tpu_custom_call.1} parent=1 // pred_check
      _
    $region11: #{tpu_custom_call.1} parent=1 // pred_check_branch
      %27 = sbr.rel (0) target = $region13
    $region12: #{tpu_custom_call.1} parent=1 // pred_region
      _
    $region13: #{tpu_custom_call.1} parent=1 // pred_fallthru
      _
    // Predicated region
    $region14: #{tpu_custom_call.1} parent=1 // pred_check
      _
    $region15: #{tpu_custom_call.1} parent=1 // pred_check_branch
      %29 = sbr.rel (0) target = $region17
    $region16: #{tpu_custom_call.1} parent=1 // pred_region
      _
    $region17: #{tpu_custom_call.1} parent=1 // pred_fallthru
      _
    // Predicated region
    $region18: #{tpu_custom_call.1} parent=1 // pred_check
      _
    $region19: #{tpu_custom_call.1} parent=1 // pred_check_branch
      %31 = sbr.rel (0) target = $region21
    $region20: #{tpu_custom_call.1} parent=1 // pred_region
      _
    $region21: #{tpu_custom_call.1} parent=1 // pred_fallthru
      _
    // Predicated region
    $region22: #{tpu_custom_call.1} parent=1 // pred_check
      _
    $region23: #{tpu_custom_call.1} parent=1 // pred_check_branch
      %33 = sbr.rel (0) target = $region25
    $region24: #{tpu_custom_call.1} parent=1 // pred_region
      _
    $region25: #{tpu_custom_call.1} parent=1 // pred_fallthru
      _
    // Predicated region
    $region26: #{tpu_custom_call.1} parent=1 // pred_check
      _
    $region27: #{tpu_custom_call.1} parent=1 // pred_check_branch
      %35 = sbr.rel (0) target = $region29
    $region28: #{tpu_custom_call.1} parent=1 // pred_region
      _
    $region29: #{tpu_custom_call.1} parent=1 // pred_fallthru
      _
    // Predicated region
    $region30: #{tpu_custom_call.1} parent=1 // pred_check
      _
    $region31: #{tpu_custom_call.1} parent=1 // pred_check_branch
      %37 = sbr.rel (0) target = $region33
    $region32: #{tpu_custom_call.1} parent=1 // pred_region
      _
    $region33: #{tpu_custom_call.1} parent=1 // pred_fallthru
      _
    // Predicated region
    $region34: #{tpu_custom_call.1} parent=1 // pred_check
      _
    $region35: #{tpu_custom_call.1} parent=1 // pred_check_branch
      %39 = sbr.rel (0) target = $region37
    $region36: #{tpu_custom_call.1} parent=1 // pred_region
      _
    $region37: #{tpu_custom_call.1} parent=1 // pred_fallthru
      _
    // Predicated region
    $region38: #{tpu_custom_call.1} parent=1 // pred_check
      _
    $region39: #{tpu_custom_call.1} parent=1 // pred_check_branch
      %41 = sbr.rel (0) target = $region41
    $region40: #{tpu_custom_call.1} parent=1 // pred_region
      _
    $region41: #{tpu_custom_call.1} parent=1 // pred_fallthru
      _
    %v43 = vld [vmem:[%s0] sm:$0xf]
    %v44 = vld [vmem:[%s0 + $0x4] sm:$0xf]
    %v45 = vld [vmem:[%s0 + $0x8] sm:$0xf]
    %v46 = vld [vmem:[%s0 + $0xc] sm:$0xf]
    %v47 = vld [vmem:[%s0 + $0x10] sm:$0xf]
    %v48 = vld [vmem:[%s0 + $0x14] sm:$0xf]
    %v49 = vld [vmem:[%s0 + $0x18] sm:$0xf]
    %v50 = vld [vmem:[%s0 + $0x1c] sm:$0xf]
    %v51 = vld [vmem:[%s2] sm:$0xf]
    %v52 = vld [vmem:[%s2 + $0x4] sm:$0xf]
    %v53 = vld [vmem:[%s2 + $0x8] sm:$0xf]
    %v54 = vld [vmem:[%s2 + $0xc] sm:$0xf]
    %v55 = vld [vmem:[%s4] sm:$0x1]
    %v57 = vlaneseq
    %v58 = vshrl.u32 %v57, 7
    %v59 = vsub.s32 0, %v58
    %v60 = vrot.slane %v55, %v59
    %v70 = vunpack.c.l.b16 %v43
    %v71 = vunpack.c.l.b16 %v44
    %v72 = vunpack.c.l.b16 %v45
    %v73 = vunpack.c.l.b16 %v46
    %v74 = vunpack.c.l.b16 %v47
    %v75 = vunpack.c.l.b16 %v48
    %v76 = vunpack.c.l.b16 %v49
    %v77 = vunpack.c.l.b16 %v50
    %v78 = vpack.c.b16 %v71, %v70
    %v79 = vpack.c.b16 %v73, %v72
    %v80 = vpack.c.b16 %v75, %v74
    %v81 = vpack.c.b16 %v77, %v76
    %v86 = vunpack.c.l.b16 %v51
    %v87 = vunpack.c.l.b16 %v52
    %v88 = vunpack.c.l.b16 %v53
    %v89 = vunpack.c.l.b16 %v54
    %v90 = vpack.c.b16 %v87, %v86
    %v91 = vpack.c.b16 %v89, %v88
    %vm94 = vcmask 261120
    %v96 = vsel %vm94, %v78, 0
    %v99 = vsel %vm94, %v79, 0
    %v102 = vsel %vm94, %v80, 0
    %v105 = vsel %vm94, %v81, 0
    %107 = vmatprep.subr.bf16.mxu0 0
    %108 = vmatpush1.bf16.msra.mxu0 %v90
    %109 = vmatprep.subr.bf16.mxu0 0
    %110 = vmatpush1.bf16.msra.mxu0 %v91
    %111 = vmatprep.subr.bf16.mxu0 0
    %112 = vmatpush1.bf16.msra.mxu0 0
    %113 = vmatprep.subr.bf16.mxu0 0
    %114 = vmatpush1.bf16.msra.mxu0 0
    %115 = vmatprep.subr.bf16.mxu0 0
    %116 = vmatpush1.bf16.msra.mxu0 0
    %117 = vmatprep.subr.bf16.mxu0 0
    %118 = vmatpush1.bf16.msra.mxu0 0
    %119 = vmatprep.subr.bf16.mxu0 0
    %120 = vmatpush1.bf16.msra.mxu0 0
    %121 = vmatprep.subr.bf16.mxu0 0
    %122 = vmatpush1.bf16.msra.mxu0 0
    %123 = vmatprep.subr.bf16.mxu0 0
    %124 = vmatpush1.bf16.msra.mxu0 0
    %125 = vmatprep.subr.bf16.mxu0 0
    %126 = vmatpush1.bf16.msra.mxu0 0
    %127 = vmatprep.subr.bf16.mxu0 0
    %128 = vmatpush1.bf16.msra.mxu0 0
    %129 = vmatprep.subr.bf16.mxu0 0
    %130 = vmatpush1.bf16.msra.mxu0 0
    %131 = vmatprep.subr.bf16.mxu0 0
    %132 = vmatpush1.bf16.msra.mxu0 0
    %133 = vmatprep.subr.bf16.mxu0 0
    %134 = vmatpush1.bf16.msra.mxu0 0
    %135 = vmatprep.subr.bf16.mxu0 0
    %136 = vmatpush1.bf16.msra.mxu0 0
    %137 = vmatprep.subr.bf16.mxu0 0
    %138 = vmatpush1.bf16.msra.mxu0 0
    %139 = vmatprep.mubr.bf16.mxu0 0
    %140 = vmatmul.mubr.bf16.gmra.mrb[0].mxu0 %v96
    %v141 = vpop.f32.mrb[0].mxu0
    %v142 = vadd.f32 %v60, %v141
    %v143 = vpop.f32.mrb[0].mxu0
    %v144 = vpop.f32.mrb[0].mxu0
    %v145 = vadd.f32 %v60, %v144
    %v146 = vpop.f32.mrb[0].mxu0
    %147 = vmatprep.mubr.bf16.mxu0 0
    %148 = vmatmul.mubr.bf16.gmra.mrb[0].mxu0 %v99
    %v149 = vpop.f32.mrb[0].mxu0
    %v150 = vadd.f32 %v60, %v149
    %v151 = vpop.f32.mrb[0].mxu0
    %v152 = vpop.f32.mrb[0].mxu0
    %v153 = vadd.f32 %v60, %v152
    %v154 = vpop.f32.mrb[0].mxu0
    %155 = vmatprep.mubr.bf16.mxu0 0
    %156 = vmatmul.mubr.bf16.gmra.mrb[0].mxu0 %v102
    %v157 = vpop.f32.mrb[0].mxu0
    %v158 = vadd.f32 %v60, %v157
    %v159 = vpop.f32.mrb[0].mxu0
    %v160 = vpop.f32.mrb[0].mxu0
    %v161 = vadd.f32 %v60, %v160
    %v162 = vpop.f32.mrb[0].mxu0
    %163 = vmatprep.mubr.bf16.mxu0 0
    %164 = vmatmul.mubr.bf16.gmra.mrb[0].mxu0 %v105
    %v165 = vpop.f32.mrb[0].mxu0
    %v166 = vadd.f32 %v60, %v165
    %v167 = vpop.f32.mrb[0].mxu0
    %v168 = vpop.f32.mrb[0].mxu0
    %v169 = vadd.f32 %v60, %v168
    %v170 = vpop.f32.mrb[0].mxu0
    %171 = vdwg.mxu0
    %vm172 = vcmask 785408
    %173 = vst.msk [vmem:[#allocation2] sm:$0xff] %vm172, %v142
    %174 = vst.msk [vmem:[#allocation2 + $0x8] sm:$0xff] %vm172, %v145
    %175 = vst.msk [vmem:[#allocation2 + $0x10] sm:$0xff] %vm172, %v150
    %176 = vst.msk [vmem:[#allocation2 + $0x18] sm:$0xff] %vm172, %v153
    %177 = vst.msk [vmem:[#allocation2 + $0x20] sm:$0xff] %vm172, %v158
    %178 = vst.msk [vmem:[#allocation2 + $0x28] sm:$0xff] %vm172, %v161
    %179 = vst.msk [vmem:[#allocation2 + $0x30] sm:$0xff] %vm172, %v166
    %180 = vst.msk [vmem:[#allocation2 + $0x38] sm:$0xff] %vm172, %v169
    %v181 = vld [vmem:[%s3] sm:$0xf]
    %v182 = vld [vmem:[%s3 + $0x4] sm:$0xf]
    %v183 = vld [vmem:[%s3 + $0x8] sm:$0xf]
    %v184 = vld [vmem:[%s3 + $0xc] sm:$0xf]
    %v185 = vld [vmem:[%s5] sm:$0x1]
    %v187 = vlaneseq
    %v188 = vshrl.u32 %v187, 7
    %v189 = vsub.s32 0, %v188
    %v190 = vrot.slane %v185, %v189
    %v191 = vld [vmem:[%s6] sm:$0xff]
    %192 = vset.pattern.permute.xlu0 0
    %193 = vperm.xlu0 %192, %v191
    %v194 = vpop.permute.xlu0 %193
    %s195 = sld [smem:[#allocation3]]
    %v196 = vld [vmem:[%s1] sm:$0xff]
    // While loop
    $region42: #{tpu_custom_call.1} parent=1 // loop_pre_header
      _
    $region43: #{tpu_custom_call.1} parent=1 // loop_header
      %s198 = sphi 0, %s200
      %p199 = scmp.ge.s32.totalorder %s198, %s195
      %v203 = vphi %v196, %v302
    $region44: #{tpu_custom_call.1} parent=1 // loop_header_branch
      %202 = sbr.rel (%p199) target = $region48
    $region45: #{tpu_custom_call.1} parent=1 // loop_body
      %v204 = vpack.c.bf16 %v203, %v203
      %v209 = vunpack.c.l.b16 %v181
      %v210 = vunpack.c.l.b16 %v182
      %v211 = vunpack.c.l.b16 %v183
      %v212 = vunpack.c.l.b16 %v184
      %v213 = vpack.c.b16 %v210, %v209
      %v214 = vpack.c.b16 %v212, %v211
      %v218 = vsel %vm94, %v204, 0
      %220 = vmatprep.subr.bf16.mxu0 0
      %221 = vmatpush1.bf16.msra.mxu0 %v213
      %222 = vmatprep.subr.bf16.mxu0 0
      %223 = vmatpush1.bf16.msra.mxu0 %v214
      %224 = vmatprep.subr.bf16.mxu0 0
      %225 = vmatpush1.bf16.msra.mxu0 0
      %226 = vmatprep.subr.bf16.mxu0 0
      %227 = vmatpush1.bf16.msra.mxu0 0
      %228 = vmatprep.subr.bf16.mxu0 0
      %229 = vmatpush1.bf16.msra.mxu0 0
      %230 = vmatprep.subr.bf16.mxu0 0
      %231 = vmatpush1.bf16.msra.mxu0 0
      %232 = vmatprep.subr.bf16.mxu0 0
      %233 = vmatpush1.bf16.msra.mxu0 0
      %234 = vmatprep.subr.bf16.mxu0 0
      %235 = vmatpush1.bf16.msra.mxu0 0
      %236 = vmatprep.subr.bf16.mxu0 0
      %237 = vmatpush1.bf16.msra.mxu0 0
      %238 = vmatprep.subr.bf16.mxu0 0
      %239 = vmatpush1.bf16.msra.mxu0 0
      %240 = vmatprep.subr.bf16.mxu0 0
      %241 = vmatpush1.bf16.msra.mxu0 0
      %242 = vmatprep.subr.bf16.mxu0 0
      %243 = vmatpush1.bf16.msra.mxu0 0
      %244 = vmatprep.subr.bf16.mxu0 0
      %245 = vmatpush1.bf16.msra.mxu0 0
      %246 = vmatprep.subr.bf16.mxu0 0
      %247 = vmatpush1.bf16.msra.mxu0 0
      %248 = vmatprep.subr.bf16.mxu0 0
      %249 = vmatpush1.bf16.msra.mxu0 0
      %250 = vmatprep.subr.bf16.mxu0 0
      %251 = vmatpush1.bf16.msra.mxu0 0
      %252 = vmatprep.mubr.bf16.mxu0 0
      %253 = vmatmul.mubr.bf16.gmra.mrb[0].mxu0 %v218
      %v254 = vpop.f32.mrb[0].mxu0
      %v255 = vadd.f32 0.0, %v254
      %v256 = vpop.f32.mrb[0].mxu0
      %v257 = vpop.f32.mrb[0].mxu0
      %v258 = vpop.f32.mrb[0].mxu0
      %259 = vdwg.mxu0
      %s260 = smul.u32 %s198, 8
      %s261 = scalar_lea.vmem [#allocation2], %s260
      %v262 = vld [vmem:[%s261] sm:$0xff]
      %v263 = vadd.f32 %v262, %v255
      %v264 = vxor.u32 %v263, 2147483648
      %v265 = vmul.f32 %v264, 1.442695
      %v266 = vpow.pop %v265
      %v267 = vadd.f32 %v266, 1.0
      %v268 = vrcp.pop %v267
      %v269 = vmul.f32 1.0, %v268
      %270 = vrot.lane.b32.xlu0 %v190, 64
      %v271 = vpop.permute.xlu0 %270
      %v273 = vadd.f32 %v255, %v271
      %275 = vrot.lane.b32.xlu0 %v273, 64
      %v276 = vpop.permute.xlu0 %275
      %v278 = vmul.f32 %v269, %v276
      %280 = vrot.lane.b32.xlu0 %v278, 64
      %v281 = vpop.permute.xlu0 %280
      %v283 = vadd.f32 %v262, %v281
      %v284 = vtanh.pop %v283
      %v285 = vsub.f32 1.0, %v269
      %287 = vrot.lane.b32.xlu0 %v284, 96
      %v288 = vpop.permute.xlu0 %287
      %v290 = vmul.f32 %v285, %v288
      %292 = vrot.lane.b32.xlu0 %v203, 32
      %v293 = vpop.permute.xlu0 %292
      %v295 = vmul.f32 %v269, %v293
      %v296 = vadd.f32 %v290, %v295
      %v297 = vstv %s198
      %vm298 = vcmp.lt.s32.totalorder %v297, %v194
      %v299 = vsel %vm298, %v296, %v293
      %301 = vrot.lane.b32.xlu0 %v299, 96
      %v302 = vpop.permute.xlu0 %301
    $region46: #{tpu_custom_call.1} parent=1 // loop_footer
      %s200 = sadd.s32 %s198, 1
    $region47: #{tpu_custom_call.1} parent=1 // loop_footer_branch
      %197 = sbr.rel target = $region43
    $region48: #{tpu_custom_call.1} parent=1 // loop_exit
      _
    %304 = vst.msk [vmem:[#allocation5] sm:$0xff] %vm94, %v203
    %v305 = vld [vmem:[%s8] sm:$0xff]
    %v306 = vld [vmem:[%s8 + $0x8] sm:$0xff]
    %v307 = vld [vmem:[%s8 + $0x10] sm:$0xff]
    %v308 = vld [vmem:[%s8 + $0x18] sm:$0xff]
    %v309 = vld [vmem:[#allocation4] sm:$0x1]
    %v311 = vlaneseq
    %v312 = vshrl.u32 %v311, 7
    %v313 = vsub.s32 0, %v312
    %v314 = vrot.slane %v309, %v313
    %v317 = vsel %vm94, %v203, 0
    %319 = vmatprep.subr.mxu0 0.0
    %320 = vmatpush1.msra.mxu0 %v305
    %321 = vmatprep.subr.mxu0 0.0
    %322 = vmatpush1.msra.mxu0 %v306
    %323 = vmatprep.subr.mxu0 0.0
    %324 = vmatpush1.msra.mxu0 %v307
    %325 = vmatprep.subr.mxu0 0.0
    %326 = vmatpush1.msra.mxu0 %v308
    %327 = vmatprep.subr.mxu0 0.0
    %328 = vmatpush1.msra.mxu0 0.0
    %329 = vmatprep.subr.mxu0 0.0
    %330 = vmatpush1.msra.mxu0 0.0
    %331 = vmatprep.subr.mxu0 0.0
    %332 = vmatpush1.msra.mxu0 0.0
    %333 = vmatprep.subr.mxu0 0.0
    %334 = vmatpush1.msra.mxu0 0.0
    %335 = vmatprep.subr.mxu0 0.0
    %336 = vmatpush1.msra.mxu0 0.0
    %337 = vmatprep.subr.mxu0 0.0
    %338 = vmatpush1.msra.mxu0 0.0
    %339 = vmatprep.subr.mxu0 0.0
    %340 = vmatpush1.msra.mxu0 0.0
    %341 = vmatprep.subr.mxu0 0.0
    %342 = vmatpush1.msra.mxu0 0.0
    %343 = vmatprep.subr.mxu0 0.0
    %344 = vmatpush1.msra.mxu0 0.0
    %345 = vmatprep.subr.mxu0 0.0
    %346 = vmatpush1.msra.mxu0 0.0
    %347 = vmatprep.subr.mxu0 0.0
    %348 = vmatpush1.msra.mxu0 0.0
    %349 = vmatprep.subr.mxu0 0.0
    %350 = vmatpush1.msra.mxu0 0.0
    %351 = vmatprep.subr.mxu0 0.0
    %352 = vmatpush1.msra.mxu0 0.0
    %353 = vmatprep.subr.mxu0 0.0
    %354 = vmatpush1.msra.mxu0 0.0
    %355 = vmatprep.subr.mxu0 0.0
    %356 = vmatpush1.msra.mxu0 0.0
    %357 = vmatprep.subr.mxu0 0.0
    %358 = vmatpush1.msra.mxu0 0.0
    %359 = vmatprep.subr.mxu0 0.0
    %360 = vmatpush1.msra.mxu0 0.0
    %361 = vmatprep.subr.mxu0 0.0
    %362 = vmatpush1.msra.mxu0 0.0
    %363 = vmatprep.subr.mxu0 0.0
    %364 = vmatpush1.msra.mxu0 0.0
    %365 = vmatprep.subr.mxu0 0.0
    %366 = vmatpush1.msra.mxu0 0.0
    %367 = vmatprep.subr.mxu0 0.0
    %368 = vmatpush1.msra.mxu0 0.0
    %369 = vmatprep.subr.mxu0 0.0
    %370 = vmatpush1.msra.mxu0 0.0
    %371 = vmatprep.subr.mxu0 0.0
    %372 = vmatpush1.msra.mxu0 0.0
    %373 = vmatprep.subr.mxu0 0.0
    %374 = vmatpush1.msra.mxu0 0.0
    %375 = vmatprep.subr.mxu0 0.0
    %376 = vmatpush1.msra.mxu0 0.0
    %377 = vmatprep.subr.mxu0 0.0
    %378 = vmatpush1.msra.mxu0 0.0
    %379 = vmatprep.subr.mxu0 0.0
    %380 = vmatpush1.msra.mxu0 0.0
    %381 = vmatprep.subr.mxu0 0.0
    %382 = vmatpush1.msra.mxu0 0.0
    %383 = vmatprep.mubr.f32.mxu0 0.0
    %384 = vmatmul.mubr.f32.gmra.mrb[0].mxu0 %v317
    %v385 = vpop.f32.mrb[0].mxu0
    %v386 = vadd.f32 %v314, %v385
    %v387 = vpop.f32.mrb[0].mxu0
    %388 = vdwg.mxu0
    %v389 = vxor.u32 %v386, 2147483648
    %v390 = vmul.f32 %v389, 1.442695
    %v391 = vpow.pop %v390
    %v392 = vadd.f32 %v391, 1.0
    %v393 = vrcp.pop %v392
    %v394 = vmul.f32 1.0, %v393
    %vm395 = vcmask 7168
    %v396 = vsel %vm395, %v394, 0.0
    %v397 = vrot.slane %v396, 4
    %v398 = vadd.f32 %v396, %v397
    %v399 = vrot.slane %v398, 2
    %v400 = vadd.f32 %v398, %v399
    %v401 = vrot.slane %v400, 1
    %v402 = vadd.f32 %v400, %v401
    %v403 = vmul.f32 %v402, 0.125
    %vm404 = vcmask 0
    %405 = vst.msk [vmem:[#allocation7] sm:$0x1] %vm404, %v403
    // Predicated region
    $region49: #{tpu_custom_call.1} parent=1 // pred_check
      _
    $region50: #{tpu_custom_call.1} parent=1 // pred_check_branch
      %407 = sbr.rel (0) target = $region52
    $region51: #{tpu_custom_call.1} parent=1 // pred_region
      %s409 = ssub.s32 128, 128
      %410 = vsyncadd [#allocation6], %s409
      %s412 = sshll.u32 [#allocation5], 4
      %s413 = int_to_ptr.vmem [resolvable:$true] %s412
      %415 = dma.vmem_to_hbm [thread:$0]  %s413, 128, %s10, [#allocation6]
    $region52: #{tpu_custom_call.1} parent=1 // pred_fallthru
      _
    // Predicated region
    $region53: #{tpu_custom_call.1} parent=1 // pred_check
      _
    $region54: #{tpu_custom_call.1} parent=1 // pred_check_branch
      %417 = sbr.rel (0) target = $region56
    $region55: #{tpu_custom_call.1} parent=1 // pred_region
      %s419 = ssub.s32 16, 16
      %420 = vsyncadd [#allocation8], %s419
      %s422 = sshll.u32 [#allocation7], 4
      %s423 = int_to_ptr.vmem [resolvable:$true] %s422
      %425 = dma.vmem_to_hbm [thread:$0]  %s423, 16, %s11, [#allocation8]
    $region56: #{tpu_custom_call.1} parent=1 // pred_fallthru
      _
    // Predicated region
    $region57: #{tpu_custom_call.1} parent=1 // pred_check
      _
    $region58: #{tpu_custom_call.1} parent=1 // pred_check_branch
      %427 = sbr.rel (0) target = $region60
    $region59: #{tpu_custom_call.1} parent=1 // pred_region
      %428 = dma.done [#allocation6], 128
    $region60: #{tpu_custom_call.1} parent=1 // pred_fallthru
      _
    // Predicated region
    $region61: #{tpu_custom_call.1} parent=1 // pred_check
      _
    $region62: #{tpu_custom_call.1} parent=1 // pred_check_branch
      %430 = sbr.rel (0) target = $region64
    $region63: #{tpu_custom_call.1} parent=1 // pred_region
      %431 = dma.done [#allocation8], 16
    $region64: #{tpu_custom_call.1} parent=1 // pred_fallthru
      _
    %432 = vsyncpa [#allocation6], 1
    %433 = vsyncpa [#allocation8], 1

</llo_original>
